<compile_context>
chip_gen: v7x
topology: tpu7x:2x2x1
jax: 0.10.0
libtpu: 0.0.40
codegen_flags: <defaults>
</compile_context>

<pallas_src>
import functools

import jax
import jax.numpy as jnp
from jax.experimental import pallas as pl
from jax.experimental.pallas import tpu as pltpu


# ----------------------------- kernel ----------------------------------------

def _mlp_kernel(x_ref, w1_ref, b1_ref, w2_ref, b2_ref, w3_ref, b3_ref, o_ref,
                *, apply_softmax: bool):
    # Matmuls on the MXU in bf16 with f32 accumulation; everything else f32.
    x = x_ref[...].astype(jnp.bfloat16)
    h1 = jnp.dot(x, w1_ref[...], preferred_element_type=jnp.float32) + b1_ref[...]
    h1 = jnp.maximum(h1, 0.0).astype(jnp.bfloat16)
    h2 = jnp.dot(h1, w2_ref[...], preferred_element_type=jnp.float32) + b2_ref[...]
    h2 = jnp.maximum(h2, 0.0).astype(jnp.bfloat16)
    # TODO(synk): if hidden ever grows past a few thousand, add a K grid axis
    # with an f32 VMEM accumulator (pl.when init/finalize) for the fc2 contraction.
    logits = jnp.dot(h2, w3_ref[...], preferred_element_type=jnp.float32) + b3_ref[...]
    if apply_softmax:
        # softmax over dim=0 (batch axis) -- matches F.softmax(..., dim=0).
        # Only ever fused with the WHOLE batch resident in one block (the
        # wrapper forces grid=1 for discrete).  Padded lane columns hold all
        # zeros -> harmless uniform values that the wrapper slices off.
        m = jnp.max(logits, axis=0, keepdims=True)
        e = jnp.exp(logits - m)
        denom = jnp.sum(e, axis=0, keepdims=True)
        inv = 1.0 / denom              # exact normalization (tiny (1, out_p))
        o_ref[...] = (e * inv).astype(o_ref.dtype)
    else:
        o_ref[...] = logits.astype(o_ref.dtype)


# ----------------------------- wrapper helpers --------------------------------

def _round_up(n, m):
    return ((n + m - 1) // m) * m


def prepare_params(params):
    """One-time conversion from PyTorch layout ((out,in) weights, (out,) biases)
    to kernel layout: (in, out) bf16 weights and (1, out) f32 biases, with the
    hidden and output widths zero-padded to multiples of 128 so every vreg is
    lane-dense (full-width vst, dense DMAs).  Zero padding + ReLU(0)=0 keeps the
    real outputs identical.  Call once at init; NO layout/dtype/pad ops run on
    the per-step forward path."""
    w1, w2, w3 = params["w1"], params["w2"], params["w3"]
    b1, b2, b3 = params["b1"], params["b2"], params["b3"]
    in_dim, hid, out_dim = w1.shape[1], w1.shape[0], w3.shape[0]
    hid_p = _round_up(hid, 128)
    out_p = _round_up(out_dim, 128)

    def pad2(a, rows, cols):
        return jnp.pad(a, ((0, rows - a.shape[0]), (0, cols - a.shape[1])))

    return {
        "w1": pad2(w1.T.astype(jnp.float32), in_dim, hid_p).astype(jnp.bfloat16),
        "w2": pad2(w2.T.astype(jnp.float32), hid_p, hid_p).astype(jnp.bfloat16),
        "w3": pad2(w3.T.astype(jnp.float32), hid_p, out_p).astype(jnp.bfloat16),
        "b1": pad2(b1.reshape(1, -1).astype(jnp.float32), 1, hid_p),
        "b2": pad2(b2.reshape(1, -1).astype(jnp.float32), 1, hid_p),
        "b3": pad2(b3.reshape(1, -1).astype(jnp.float32), 1, out_p),
        "out_dim": int(out_dim),     # real (unpadded) output width
    }


def _pick_batch_block(batch, discrete):
    """Single full-batch block (grid=1) is the common case: no per-step grid
    overhead and (for discrete) the dim=0 softmax fuses in-kernel.  Only very
    large continuous batches are tiled: exactly 2 parallel blocks (one per v7x
    TensorCore) when that fits, else >=512-row blocks near the HBM roofline."""
    if discrete:
        # dim=0 softmax couples every row -> keep the whole batch in one block.
        # TODO(synk): for discrete batches beyond ~50k rows, add a two-phase
        # cross-block softmax reduction (P3) instead of one giant block.
        return batch
    if batch <= 4096 or batch % 16 != 0:
        return batch
    half = batch // 2
    if half <= 8192:
        return half                      # grid=(2,), "parallel" -> both v7x TCs
    bm = 4096
    while batch % bm != 0:
        bm //= 2
        if bm < 512:
            return batch                 # awkward size: fall back to one block
    return bm


def _physical_vmem_bytes():
    try:
        info = pltpu.get_tpu_info()
        return int(getattr(info, "vmem_capacity_bytes", 64 * 1024 * 1024))
    except Exception:                    # pragma: no cover - conservative default
        return 64 * 1024 * 1024          # v7x-sized fallback


def _vmem_limit_bytes(bm, in_dim, hid_p, out_p, single_buffer_weights):
    """Realistic footprint: weights x1 when single-buffered (constant blocks),
    x2 otherwise; x/out blocks double-buffered; f32 + bf16 intermediates; 1.5x
    slack.  Clamped generation-aware to 3/4 of the chip's physical VMEM."""
    wbuf = 1 if single_buffer_weights else 2
    weights = wbuf * 2 * (in_dim * hid_p + hid_p * hid_p + hid_p * out_p)   # bf16
    biases = wbuf * 4 * (2 * hid_p + out_p)
    io = 2 * 4 * (bm * in_dim + bm * out_p)                                 # f32, 2 bufs
    inter = 4 * bm * (2 * hid_p + out_p) + 2 * bm * (in_dim + 2 * hid_p)    # f32 + bf16
    est = int(1.5 * (weights + biases + io + inter)) + (4 << 20)
    cap = (3 * _physical_vmem_bytes()) // 4
    return int(min(max(est, 8 << 20), cap))


# ----------------------------- forward ----------------------------------------

def mlp_forward(x, prep, *, discrete: bool):
    """x: (B, input_size) f32.  prep: output of prepare_params()."""
    B, in_dim = x.shape
    hid_p = prep["w1"].shape[1]
    out_p = prep["w3"].shape[1]
    out_dim = prep["out_dim"]

    bm = _pick_batch_block(B, discrete)
    n_blocks = B // bm
    assert (not discrete) or n_blocks == 1   # softmax over dim=0 needs one block

    # Resident weights (index_map -> (0,0)) only need a single pipeline buffer;
    # request it once they are big enough to matter so the design still fits
    # v7x's 64 MiB VMEM when hidden grows.  Tiny weights keep the default.
    weight_bytes = 2 * (in_dim * hid_p + hid_p * hid_p + hid_p * out_p)
    single_buf = (n_blocks > 1) and (weight_bytes > (8 << 20))
    w_kw = {"pipeline_mode": pl.Buffered(1)} if single_buf else {}

    kernel = functools.partial(_mlp_kernel, apply_softmax=discrete)

    out_padded = pl.pallas_call(
        kernel,
        out_shape=jax.ShapeDtypeStruct((B, out_p), jnp.float32),
        grid=(n_blocks,),
        in_specs=[
            pl.BlockSpec((bm, in_dim), lambda i: (i, 0)),            # x: batch tiles
            pl.BlockSpec((in_dim, hid_p), lambda i: (0, 0), **w_kw), # w1: resident
            pl.BlockSpec((1, hid_p), lambda i: (0, 0), **w_kw),      # b1
            pl.BlockSpec((hid_p, hid_p), lambda i: (0, 0), **w_kw),  # w2
            pl.BlockSpec((1, hid_p), lambda i: (0, 0), **w_kw),      # b2
            pl.BlockSpec((hid_p, out_p), lambda i: (0, 0), **w_kw),  # w3
            pl.BlockSpec((1, out_p), lambda i: (0, 0), **w_kw),      # b3
        ],
        out_specs=pl.BlockSpec((bm, out_p), lambda i: (i, 0)),       # lane-dense out
        compiler_params=pltpu.CompilerParams(
            dimension_semantics=("parallel",),
            vmem_limit_bytes=_vmem_limit_bytes(bm, in_dim, hid_p, out_p, single_buf),
        ),
    )(x, prep["w1"], prep["b1"], prep["w2"], prep["b2"], prep["w3"], prep["b3"])

    if out_p == out_dim:
        return out_padded
    return out_padded[:, :out_dim]       # drop the zero-padded lane columns once


# ----------------------------- init & reference --------------------------------

def init_params(key, input_size, output_size, hidden_size, discrete):
    """Mirrors the PyTorch module: weights ~ N(0, 0.1), biases ~ nn.Linear
    default U(-1/sqrt(fan_in), 1/sqrt(fan_in)).  PyTorch (out, in) layout."""
    out3 = output_size if discrete else output_size * 2
    ks = jax.random.split(key, 6)

    def w(k, out_f, in_f):
        return 0.1 * jax.random.normal(k, (out_f, in_f), dtype=jnp.float32)

    def b(k, out_f, in_f):
        bound = 1.0 / jnp.sqrt(jnp.float32(in_f))
        return jax.random.uniform(k, (out_f,), minval=-bound, maxval=bound,
                                  dtype=jnp.float32)

    return {
        "w1": w(ks[0], hidden_size, input_size), "b1": b(ks[1], hidden_size, input_size),
        "w2": w(ks[2], hidden_size, hidden_size), "b2": b(ks[3], hidden_size, hidden_size),
        "w3": w(ks[4], out3, hidden_size), "b3": b(ks[5], out3, hidden_size),
    }


def _ref_forward(x, params, *, discrete: bool, bf16: bool = False):
    """Pure-JAX reference.  bf16=False: exact f32 PyTorch semantics.
    bf16=True: mimics the kernel's bf16-matmul / f32-accumulate numerics."""
    def mm(a, w):
        if bf16:
            return jnp.dot(a.astype(jnp.bfloat16), w.T.astype(jnp.bfloat16),
                           preferred_element_type=jnp.float32)
        return a @ w.T

    h1 = jnp.maximum(mm(x, params["w1"]) + params["b1"], 0.0)
    h2 = jnp.maximum(mm(h1, params["w2"]) + params["b2"], 0.0)
    logits = mm(h2, params["w3"]) + params["b3"]
    if discrete:
        return jax.nn.softmax(logits, axis=0)
    return logits


# ----------------------------- smoke test --------------------------------------

if __name__ == "__main__":
    key = jax.random.PRNGKey(0)
    k_x, k_x2, k_p1, k_p2 = jax.random.split(key, 4)

    input_size, hidden_size, output_size = 4, 16, 2

    params_d = init_params(k_p1, input_size, output_size, hidden_size, discrete=True)
    params_c = init_params(k_p2, input_size, output_size, hidden_size, discrete=False)
    prep_d = prepare_params(params_d)   # one-time layout / dtype / pad conversion
    prep_c = prepare_params(params_c)

    # --- small batch: grid = 1, softmax fused in-kernel for discrete ----------
    B = 8
    x = jax.random.normal(k_x, (B, input_size), dtype=jnp.float32)

    out_d = mlp_forward(x, prep_d, discrete=True)
    jax.block_until_ready(out_d)
    assert out_d.shape == (B, output_size)
    assert jnp.allclose(out_d, _ref_forward(x, params_d, discrete=True, bf16=True),
                        atol=2e-3, rtol=2e-3)
    assert jnp.allclose(out_d, _ref_forward(x, params_d, discrete=True),
                        atol=5e-2, rtol=5e-2)
    assert jnp.allclose(out_d.sum(axis=0), 1.0, atol=1e-3)

    out_c = mlp_forward(x, prep_c, discrete=False)
    jax.block_until_ready(out_c)
    assert out_c.shape == (B, output_size * 2)
    assert jnp.allclose(out_c, _ref_forward(x, params_c, discrete=False, bf16=True),
                        atol=2e-3, rtol=2e-3)
    assert jnp.allclose(out_c, _ref_forward(x, params_c, discrete=False),
                        atol=5e-2, rtol=5e-2)

    # --- large batch --------------------------------------------------------
    # discrete: still a single block (softmax fused, no second pallas_call)
    # continuous: grid=(2,) "parallel" -> one block per v7x TensorCore
    Bl = 8192
    xl = jax.random.normal(k_x2, (Bl, input_size), dtype=jnp.float32)

    out_dl = mlp_forward(xl, prep_d, discrete=True)
    jax.block_until_ready(out_dl)
    assert out_dl.shape == (Bl, output_size)
    assert jnp.allclose(out_dl, _ref_forward(xl, params_d, discrete=True, bf16=True),
                        atol=2e-3, rtol=2e-3)
    assert jnp.allclose(out_dl.sum(axis=0), 1.0, atol=1e-3)

    out_cl = mlp_forward(xl, prep_c, discrete=False)
    jax.block_until_ready(out_cl)
    assert out_cl.shape == (Bl, output_size * 2)
    assert jnp.allclose(out_cl, _ref_forward(xl, params_c, discrete=False, bf16=True),
                        atol=2e-3, rtol=2e-3)
    assert jnp.allclose(out_cl, _ref_forward(xl, params_c, discrete=False),
                        atol=5e-2, rtol=5e-2)

    print("KERNEL_OK")
</pallas_src>

<mosaic_0001>
module attributes {stable_mosaic.version = 11 : i64} {
  func.func @_mlp_kernel(%arg0: i32, %arg1: memref<8x4xf32, #tpu.memory_space<vmem>>, %arg2: memref<4x128xbf16, #tpu.memory_space<vmem>>, %arg3: memref<1x128xf32, #tpu.memory_space<vmem>>, %arg4: memref<128x128xbf16, #tpu.memory_space<vmem>>, %arg5: memref<1x128xf32, #tpu.memory_space<vmem>>, %arg6: memref<128x128xbf16, #tpu.memory_space<vmem>>, %arg7: memref<1x128xf32, #tpu.memory_space<vmem>>, %arg8: memref<8x128xf32, #tpu.memory_space<vmem>>) attributes {dimension_semantics = [#tpu.dimension_semantics<parallel>], iteration_bounds = array<i64: 1>, scalar_prefetch = 0 : i64, scratch_operands = 0 : i64, tpu.core_type = #tpu.core_type<tc>, window_params = [{transform_indices = @transform_0, window_bounds = array<i64: 8, 4>}, {pipeline_mode = #tpu.pipeline_mode<synchronous>, transform_indices = @transform_1, window_bounds = array<i64: 4, 128>}, {pipeline_mode = #tpu.pipeline_mode<synchronous>, transform_indices = @transform_2, window_bounds = array<i64: 1, 128>}, {pipeline_mode = #tpu.pipeline_mode<synchronous>, transform_indices = @transform_3, window_bounds = array<i64: 128, 128>}, {pipeline_mode = #tpu.pipeline_mode<synchronous>, transform_indices = @transform_4, window_bounds = array<i64: 1, 128>}, {pipeline_mode = #tpu.pipeline_mode<synchronous>, transform_indices = @transform_5, window_bounds = array<i64: 128, 128>}, {pipeline_mode = #tpu.pipeline_mode<synchronous>, transform_indices = @transform_6, window_bounds = array<i64: 1, 128>}, {transform_indices = @transform_7, window_bounds = array<i64: 8, 128>}]} {
    %c0 = arith.constant 0 : index
    %c0_0 = arith.constant 0 : index
    %0 = vector.load %arg1[%c0, %c0_0] : memref<8x4xf32, #tpu.memory_space<vmem>>, vector<8x4xf32>
    %1 = arith.truncf %0 : vector<8x4xf32> to vector<8x4xbf16>
    %c0_1 = arith.constant 0 : index
    %c0_2 = arith.constant 0 : index
    %2 = vector.load %arg2[%c0_1, %c0_2] : memref<4x128xbf16, #tpu.memory_space<vmem>>, vector<4x128xbf16>
    %cst = arith.constant dense<0.000000e+00> : vector<8x128xf32>
    %3 = tpu.matmul %1, %2, %cst {dimension_numbers = #tpu.dot_dimension_numbers<[1], [0], [0], [1], [0, 0, 1, 1], [], []>} : vector<8x4xbf16>, vector<4x128xbf16>, vector<8x128xf32> -> vector<8x128xf32>
    %c0_3 = arith.constant 0 : index
    %c0_4 = arith.constant 0 : index
    %4 = vector.load %arg3[%c0_3, %c0_4] : memref<1x128xf32, #tpu.memory_space<vmem>>, vector<1x128xf32>
    %5 = vector.broadcast %4 : vector<1x128xf32> to vector<8x128xf32>
    %6 = arith.addf %3, %5 : vector<8x128xf32>
    %cst_5 = arith.constant 0.000000e+00 : f32
    %7 = vector.broadcast %cst_5 : f32 to vector<8x128xf32>
    %8 = arith.maximumf %6, %7 : vector<8x128xf32>
    %9 = arith.truncf %8 : vector<8x128xf32> to vector<8x128xbf16>
    %c0_6 = arith.constant 0 : index
    %c0_7 = arith.constant 0 : index
    %10 = vector.load %arg4[%c0_6, %c0_7] : memref<128x128xbf16, #tpu.memory_space<vmem>>, vector<128x128xbf16>
    %cst_8 = arith.constant dense<0.000000e+00> : vector<8x128xf32>
    %11 = tpu.matmul %9, %10, %cst_8 {dimension_numbers = #tpu.dot_dimension_numbers<[1], [0], [0], [1], [0, 0, 1, 1], [], []>} : vector<8x128xbf16>, vector<128x128xbf16>, vector<8x128xf32> -> vector<8x128xf32>
    %c0_9 = arith.constant 0 : index
    %c0_10 = arith.constant 0 : index
    %12 = vector.load %arg5[%c0_9, %c0_10] : memref<1x128xf32, #tpu.memory_space<vmem>>, vector<1x128xf32>
    %13 = vector.broadcast %12 : vector<1x128xf32> to vector<8x128xf32>
    %14 = arith.addf %11, %13 : vector<8x128xf32>
    %cst_11 = arith.constant 0.000000e+00 : f32
    %15 = vector.broadcast %cst_11 : f32 to vector<8x128xf32>
    %16 = arith.maximumf %14, %15 : vector<8x128xf32>
    %17 = arith.truncf %16 : vector<8x128xf32> to vector<8x128xbf16>
    %c0_12 = arith.constant 0 : index
    %c0_13 = arith.constant 0 : index
    %18 = vector.load %arg6[%c0_12, %c0_13] : memref<128x128xbf16, #tpu.memory_space<vmem>>, vector<128x128xbf16>
    %cst_14 = arith.constant dense<0.000000e+00> : vector<8x128xf32>
    %19 = tpu.matmul %17, %18, %cst_14 {dimension_numbers = #tpu.dot_dimension_numbers<[1], [0], [0], [1], [0, 0, 1, 1], [], []>} : vector<8x128xbf16>, vector<128x128xbf16>, vector<8x128xf32> -> vector<8x128xf32>
    %c0_15 = arith.constant 0 : index
    %c0_16 = arith.constant 0 : index
    %20 = vector.load %arg7[%c0_15, %c0_16] : memref<1x128xf32, #tpu.memory_space<vmem>>, vector<1x128xf32>
    %21 = vector.broadcast %20 : vector<1x128xf32> to vector<8x128xf32>
    %22 = arith.addf %19, %21 : vector<8x128xf32>
    %cst_17 = arith.constant dense<0xFF800000> : vector<128xf32>
    %23 = vector.multi_reduction <maximumf>, %22, %cst_17 [0] : vector<8x128xf32> to vector<128xf32>
    %24 = vector.shape_cast %23 : vector<128xf32> to vector<1x128xf32>
    %25 = vector.broadcast %24 : vector<1x128xf32> to vector<8x128xf32>
    %26 = arith.subf %22, %25 : vector<8x128xf32>
    %27 = math.exp %26 : vector<8x128xf32>
    %cst_18 = arith.constant dense<0.000000e+00> : vector<128xf32>
    %28 = vector.multi_reduction <add>, %27, %cst_18 [0] : vector<8x128xf32> to vector<128xf32>
    %29 = vector.shape_cast %28 : vector<128xf32> to vector<1x128xf32>
    %cst_19 = arith.constant 1.000000e+00 : f32
    %30 = vector.broadcast %cst_19 : f32 to vector<1x128xf32>
    %31 = arith.divf %30, %29 : vector<1x128xf32>
    %32 = vector.broadcast %31 : vector<1x128xf32> to vector<8x128xf32>
    %33 = arith.mulf %27, %32 : vector<8x128xf32>
    %c0_20 = arith.constant 0 : index
    %c0_21 = arith.constant 0 : index
    %34 = vector.load %arg8[%c0_20, %c0_21] : memref<8x128xf32, #tpu.memory_space<vmem>>, vector<8x128xf32>
    tpu.vector_store %arg8[%c0_20, %c0_21], %33 {strides = array<i32>} : memref<8x128xf32, #tpu.memory_space<vmem>>, vector<8x128xf32>,
    return
  }
  func.func @transform_0(%arg0: i32) -> (i32, i32) {
    %c0_i32 = arith.constant 0 : i32
    %c0_i32_0 = arith.constant 0 : i32
    return %arg0, %c0_i32 : i32, i32
  }
  func.func @transform_1(%arg0: i32) -> (i32, i32) {
    %c0_i32 = arith.constant 0 : i32
    %c0_i32_0 = arith.constant 0 : i32
    %c0_i32_1 = arith.constant 0 : i32
    return %c0_i32, %c0_i32_0 : i32, i32
  }
  func.func @transform_2(%arg0: i32) -> (i32, i32) {
    %c0_i32 = arith.constant 0 : i32
    %c0_i32_0 = arith.constant 0 : i32
    %c0_i32_1 = arith.constant 0 : i32
    return %c0_i32, %c0_i32_0 : i32, i32
  }
  func.func @transform_3(%arg0: i32) -> (i32, i32) {
    %c0_i32 = arith.constant 0 : i32
    %c0_i32_0 = arith.constant 0 : i32
    %c0_i32_1 = arith.constant 0 : i32
    return %c0_i32, %c0_i32_0 : i32, i32
  }
  func.func @transform_4(%arg0: i32) -> (i32, i32) {
    %c0_i32 = arith.constant 0 : i32
    %c0_i32_0 = arith.constant 0 : i32
    %c0_i32_1 = arith.constant 0 : i32
    return %c0_i32, %c0_i32_0 : i32, i32
  }
  func.func @transform_5(%arg0: i32) -> (i32, i32) {
    %c0_i32 = arith.constant 0 : i32
    %c0_i32_0 = arith.constant 0 : i32
    %c0_i32_1 = arith.constant 0 : i32
    return %c0_i32, %c0_i32_0 : i32, i32
  }
  func.func @transform_6(%arg0: i32) -> (i32, i32) {
    %c0_i32 = arith.constant 0 : i32
    %c0_i32_0 = arith.constant 0 : i32
    %c0_i32_1 = arith.constant 0 : i32
    return %c0_i32, %c0_i32_0 : i32, i32
  }
  func.func @transform_7(%arg0: i32) -> (i32, i32) {
    %c0_i32 = arith.constant 0 : i32
    %c0_i32_0 = arith.constant 0 : i32
    return %arg0, %c0_i32 : i32, i32
  }
}

</mosaic_0001>

<llo_original>
// kernel: tpu_custom_call.1
$region0: #{tpu_custom_call.1}
  #allocation0 [shape = 'u32[]', space=smem, size = 0x4, offset = 0x4, fixed_abs, tag = 'smem constant byte address 0x4 - core index']
  #allocation1 [shape = 'u32[144,128]{1,0:T(1,128)}', space=vmem, size = 0x12000, scoped, tag = 'internal scratch']
  %s0 = inlined_call_operand.vmem [shape: f32[8,4], index: 0, kind: input, shape index: {}]
  %s1 = inlined_call_operand.vmem [shape: bf16[4,128], index: 1, kind: input, shape index: {}]
  %s2 = inlined_call_operand.vmem [shape: f32[1,128], index: 2, kind: input, shape index: {}]
  %s3 = inlined_call_operand.hbm [shape: bf16[128,128], index: 3, kind: input, shape index: {}]
  %s4 = inlined_call_operand.vmem [shape: f32[1,128], index: 4, kind: input, shape index: {}]
  %s5 = inlined_call_operand.hbm [shape: bf16[128,128], index: 5, kind: input, shape index: {}]
  %s6 = inlined_call_operand.vmem [shape: f32[1,128], index: 6, kind: input, shape index: {}]
  %s7 = inlined_call_operand.hbm [shape: f32[8,128], index: 7, kind: output, shape index: {}]
  %s8 = sld [smem:[#allocation0]]
  $region46: #{tpu_custom_call.1} parent=0
    _
  %s10 = ssub.s32 1, %s8
  %s11 = scalar_select 0, %s10, %s8
  $region1: #{tpu_custom_call.1} parent=0
    #allocation2 [shape = 'u8[32768]{0}', space=vmem, size = 0x8000, scoped, tag = 'input window, operand 3, single buffered']
    #allocation3 [shape = 's32[1]{0}', space=sflag, size = 0x4, scoped, tag = 'scoped memory for tpu_custom_call.1']
    #allocation4 [shape = 's32[1]{0}', space=sflag, size = 0x4, scoped, tag = 'scoped memory for tpu_custom_call.1']
    #allocation5 [shape = 'u8[32768]{0}', space=vmem, size = 0x8000, scoped, tag = 'input window, operand 5, single buffered']
    #allocation6 [shape = 's32[1]{0}', space=sflag, size = 0x4, scoped, tag = 'scoped memory for tpu_custom_call.1']
    #allocation7 [shape = 'u8[4096]{0}', space=vmem, size = 0x1000, scoped, tag = 'output window, operand 0, single buffered']
    %12 = vsyncpa [#allocation3], 0
    %13 = vsyncpa [#allocation6], 0
    %14 = vsyncpa [#allocation4], 0
    // Predicated region
    $region2: #{tpu_custom_call.1} parent=1 // pred_check
      _
    $region3: #{tpu_custom_call.1} parent=1 // pred_check_branch
      %16 = sbr.rel (0) target = $region5
    $region4: #{tpu_custom_call.1} parent=1 // pred_region
      _
    $region5: #{tpu_custom_call.1} parent=1 // pred_fallthru
      _
    // Predicated region
    $region6: #{tpu_custom_call.1} parent=1 // pred_check
      _
    $region7: #{tpu_custom_call.1} parent=1 // pred_check_branch
      %18 = sbr.rel (0) target = $region9
    $region8: #{tpu_custom_call.1} parent=1 // pred_region
      _
    $region9: #{tpu_custom_call.1} parent=1 // pred_fallthru
      _
    // Predicated region
    $region10: #{tpu_custom_call.1} parent=1 // pred_check
      _
    $region11: #{tpu_custom_call.1} parent=1 // pred_check_branch
      %20 = sbr.rel (0) target = $region13
    $region12: #{tpu_custom_call.1} parent=1 // pred_region
      _
    $region13: #{tpu_custom_call.1} parent=1 // pred_fallthru
      _
    // Predicated region
    $region14: #{tpu_custom_call.1} parent=1 // pred_check
      _
    $region15: #{tpu_custom_call.1} parent=1 // pred_check_branch
      %22 = sbr.rel (0) target = $region17
    $region16: #{tpu_custom_call.1} parent=1 // pred_region
      %s24 = ssub.s32 1024, 1024
      %25 = vsyncadd [#allocation3], %s24
      %s26 = sshll.u32 [#allocation2], 4
      %s27 = int_to_ptr.vmem [resolvable:$true] %s26
      %32 = dma.hbm_to_vmem [thread:$0]  %s3, 1024, %s27, [#allocation3], 64, 64, 4
    $region17: #{tpu_custom_call.1} parent=1 // pred_fallthru
      _
    // Predicated region
    $region18: #{tpu_custom_call.1} parent=1 // pred_check
      _
    $region19: #{tpu_custom_call.1} parent=1 // pred_check_branch
      %34 = sbr.rel (0) target = $region21
    $region20: #{tpu_custom_call.1} parent=1 // pred_region
      _
    $region21: #{tpu_custom_call.1} parent=1 // pred_fallthru
      _
    // Predicated region
    $region22: #{tpu_custom_call.1} parent=1 // pred_check
      _
    $region23: #{tpu_custom_call.1} parent=1 // pred_check_branch
      %36 = sbr.rel (0) target = $region25
    $region24: #{tpu_custom_call.1} parent=1 // pred_region
      %s38 = ssub.s32 1024, 1024
      %39 = vsyncadd [#allocation6], %s38
      %s40 = sshll.u32 [#allocation5], 4
      %s41 = int_to_ptr.vmem [resolvable:$true] %s40
      %46 = dma.hbm_to_vmem [thread:$0]  %s5, 1024, %s41, [#allocation6], 64, 64, 4
    $region25: #{tpu_custom_call.1} parent=1 // pred_fallthru
      _
    // Predicated region
    $region26: #{tpu_custom_call.1} parent=1 // pred_check
      _
    $region27: #{tpu_custom_call.1} parent=1 // pred_check_branch
      %48 = sbr.rel (0) target = $region29
    $region28: #{tpu_custom_call.1} parent=1 // pred_region
      _
    $region29: #{tpu_custom_call.1} parent=1 // pred_fallthru
      _
    // Predicated region
    $region30: #{tpu_custom_call.1} parent=1 // pred_check
      _
    $region31: #{tpu_custom_call.1} parent=1 // pred_check_branch
      %50 = sbr.rel (0) target = $region33
    $region32: #{tpu_custom_call.1} parent=1 // pred_region
      %51 = dma.done [#allocation3], 1024
    $region33: #{tpu_custom_call.1} parent=1 // pred_fallthru
      _
    // Predicated region
    $region34: #{tpu_custom_call.1} parent=1 // pred_check
      _
    $region35: #{tpu_custom_call.1} parent=1 // pred_check_branch
      %53 = sbr.rel (0) target = $region37
    $region36: #{tpu_custom_call.1} parent=1 // pred_region
      %54 = dma.done [#allocation6], 1024
    $region37: #{tpu_custom_call.1} parent=1 // pred_fallthru
      _
    %v56 = vld [vmem:[%s0] sm:$0xff]
    %v57 = vpack.c.bf16 %v56, %v56
    %v58 = vld [vmem:[%s1] sm:$0x3]
    %v59 = vld [vmem:[%s2] sm:$0x1]
    %v61 = vlaneseq
    %v62 = vshrl.u32 %v61, 7
    %v63 = vsub.s32 0, %v62
    %v64 = vrot.slane %v59, %v63
    %vm66 = vcmask 31744
    %v68 = vsel %vm66, %v57, 0
    %vm70 = vcmask 1041408
    %v72 = vsel %vm70, %v58, 0
    %74 = vmatprep.subr.bf16.mxu0 0
    %75 = vmatpush1.bf16.msra.mxu0 %v72
    %76 = vmatprep.subr.bf16.mxu0 0
    %77 = vmatpush1.bf16.msra.mxu0 0
    %78 = vmatprep.subr.bf16.mxu0 0
    %79 = vmatpush1.bf16.msra.mxu0 0
    %80 = vmatprep.subr.bf16.mxu0 0
    %81 = vmatpush1.bf16.msra.mxu0 0
    %82 = vmatprep.subr.bf16.mxu0 0
    %83 = vmatpush1.bf16.msra.mxu0 0
    %84 = vmatprep.subr.bf16.mxu0 0
    %85 = vmatpush1.bf16.msra.mxu0 0
    %86 = vmatprep.subr.bf16.mxu0 0
    %87 = vmatpush1.bf16.msra.mxu0 0
    %88 = vmatprep.subr.bf16.mxu0 0
    %89 = vmatpush1.bf16.msra.mxu0 0
    %90 = vmatprep.subr.bf16.mxu0 0
    %91 = vmatpush1.bf16.msra.mxu0 0
    %92 = vmatprep.subr.bf16.mxu0 0
    %93 = vmatpush1.bf16.msra.mxu0 0
    %94 = vmatprep.subr.bf16.mxu0 0
    %95 = vmatpush1.bf16.msra.mxu0 0
    %96 = vmatprep.subr.bf16.mxu0 0
    %97 = vmatpush1.bf16.msra.mxu0 0
    %98 = vmatprep.subr.bf16.mxu0 0
    %99 = vmatpush1.bf16.msra.mxu0 0
    %100 = vmatprep.subr.bf16.mxu0 0
    %101 = vmatpush1.bf16.msra.mxu0 0
    %102 = vmatprep.subr.bf16.mxu0 0
    %103 = vmatpush1.bf16.msra.mxu0 0
    %104 = vmatprep.subr.bf16.mxu0 0
    %105 = vmatpush1.bf16.msra.mxu0 0
    %106 = vmatprep.mubr.bf16.mxu0 0
    %107 = vmatmul.mubr.bf16.gmra.mrb[0].mxu0 %v68
    %v108 = vpop.f32.mrb[0].mxu0
    %v109 = vadd.f32 %v64, %v108
    %v110 = vpop.f32.mrb[0].mxu0
    %v111 = vpop.f32.mrb[0].mxu0
    %v112 = vpop.f32.mrb[0].mxu0
    %113 = vdwg.mxu0
    %v114 = vmax.f32 %v109, 0.0
    %v115 = vpack.c.bf16 %v114, %v114
    %v116 = vld [vmem:[#allocation2] sm:$0xf]
    %v117 = vld [vmem:[#allocation2 + $0x4] sm:$0xf]
    %v118 = vld [vmem:[#allocation2 + $0x8] sm:$0xf]
    %v119 = vld [vmem:[#allocation2 + $0xc] sm:$0xf]
    %v120 = vld [vmem:[#allocation2 + $0x10] sm:$0xf]
    %v121 = vld [vmem:[#allocation2 + $0x14] sm:$0xf]
    %v122 = vld [vmem:[#allocation2 + $0x18] sm:$0xf]
    %v123 = vld [vmem:[#allocation2 + $0x1c] sm:$0xf]
    %v124 = vld [vmem:[#allocation2 + $0x20] sm:$0xf]
    %v125 = vld [vmem:[#allocation2 + $0x24] sm:$0xf]
    %v126 = vld [vmem:[#allocation2 + $0x28] sm:$0xf]
    %v127 = vld [vmem:[#allocation2 + $0x2c] sm:$0xf]
    %v128 = vld [vmem:[#allocation2 + $0x30] sm:$0xf]
    %v129 = vld [vmem:[#allocation2 + $0x34] sm:$0xf]
    %v130 = vld [vmem:[#allocation2 + $0x38] sm:$0xf]
    %v131 = vld [vmem:[#allocation2 + $0x3c] sm:$0xf]
    %v132 = vld [vmem:[%s4] sm:$0x1]
    %v134 = vlaneseq
    %v135 = vshrl.u32 %v134, 7
    %v136 = vsub.s32 0, %v135
    %v137 = vrot.slane %v132, %v136
    %v155 = vunpack.c.l.b16 %v116
    %v156 = vunpack.c.l.b16 %v117
    %v157 = vunpack.c.l.b16 %v118
    %v158 = vunpack.c.l.b16 %v119
    %v159 = vunpack.c.l.b16 %v120
    %v160 = vunpack.c.l.b16 %v121
    %v161 = vunpack.c.l.b16 %v122
    %v162 = vunpack.c.l.b16 %v123
    %v163 = vunpack.c.l.b16 %v124
    %v164 = vunpack.c.l.b16 %v125
    %v165 = vunpack.c.l.b16 %v126
    %v166 = vunpack.c.l.b16 %v127
    %v167 = vunpack.c.l.b16 %v128
    %v168 = vunpack.c.l.b16 %v129
    %v169 = vunpack.c.l.b16 %v130
    %v170 = vunpack.c.l.b16 %v131
    %v171 = vpack.c.b16 %v156, %v155
    %v172 = vpack.c.b16 %v158, %v157
    %v173 = vpack.c.b16 %v160, %v159
    %v174 = vpack.c.b16 %v162, %v161
    %v175 = vpack.c.b16 %v164, %v163
    %v176 = vpack.c.b16 %v166, %v165
    %v177 = vpack.c.b16 %v168, %v167
    %v178 = vpack.c.b16 %v170, %v169
    %187 = vmatprep.subr.bf16.mxu0 0
    %188 = vmatpush1.bf16.msra.mxu0 %v171
    %189 = vmatprep.subr.bf16.mxu0 0
    %190 = vmatpush1.bf16.msra.mxu0 %v172
    %191 = vmatprep.subr.bf16.mxu0 0
    %192 = vmatpush1.bf16.msra.mxu0 %v173
    %193 = vmatprep.subr.bf16.mxu0 0
    %194 = vmatpush1.bf16.msra.mxu0 %v174
    %195 = vmatprep.subr.bf16.mxu0 0
    %196 = vmatpush1.bf16.msra.mxu0 %v175
    %197 = vmatprep.subr.bf16.mxu0 0
    %198 = vmatpush1.bf16.msra.mxu0 %v176
    %199 = vmatprep.subr.bf16.mxu0 0
    %200 = vmatpush1.bf16.msra.mxu0 %v177
    %201 = vmatprep.subr.bf16.mxu0 0
    %202 = vmatpush1.bf16.msra.mxu0 %v178
    %203 = vmatprep.subr.bf16.mxu0 0
    %204 = vmatpush1.bf16.msra.mxu0 0
    %205 = vmatprep.subr.bf16.mxu0 0
    %206 = vmatpush1.bf16.msra.mxu0 0
    %207 = vmatprep.subr.bf16.mxu0 0
    %208 = vmatpush1.bf16.msra.mxu0 0
    %209 = vmatprep.subr.bf16.mxu0 0
    %210 = vmatpush1.bf16.msra.mxu0 0
    %211 = vmatprep.subr.bf16.mxu0 0
    %212 = vmatpush1.bf16.msra.mxu0 0
    %213 = vmatprep.subr.bf16.mxu0 0
    %214 = vmatpush1.bf16.msra.mxu0 0
    %215 = vmatprep.subr.bf16.mxu0 0
    %216 = vmatpush1.bf16.msra.mxu0 0
    %217 = vmatprep.subr.bf16.mxu0 0
    %218 = vmatpush1.bf16.msra.mxu0 0
    %219 = vmatprep.mubr.bf16.mxu0 0
    %220 = vmatmul.mubr.bf16.gmra.mrb[0].mxu0 %v115
    %v221 = vpop.f32.mrb[0].mxu0
    %v222 = vadd.f32 %v137, %v221
    %v223 = vpop.f32.mrb[0].mxu0
    %v224 = vpop.f32.mrb[0].mxu0
    %v225 = vpop.f32.mrb[0].mxu0
    %226 = vdwg.mxu0
    %v227 = vmax.f32 %v222, 0.0
    %v228 = vpack.c.bf16 %v227, %v227
    %v229 = vld [vmem:[#allocation5] sm:$0xf]
    %v230 = vld [vmem:[#allocation5 + $0x4] sm:$0xf]
    %v231 = vld [vmem:[#allocation5 + $0x8] sm:$0xf]
    %v232 = vld [vmem:[#allocation5 + $0xc] sm:$0xf]
    %v233 = vld [vmem:[#allocation5 + $0x10] sm:$0xf]
    %v234 = vld [vmem:[#allocation5 + $0x14] sm:$0xf]
    %v235 = vld [vmem:[#allocation5 + $0x18] sm:$0xf]
    %v236 = vld [vmem:[#allocation5 + $0x1c] sm:$0xf]
    %v237 = vld [vmem:[#allocation5 + $0x20] sm:$0xf]
    %v238 = vld [vmem:[#allocation5 + $0x24] sm:$0xf]
    %v239 = vld [vmem:[#allocation5 + $0x28] sm:$0xf]
    %v240 = vld [vmem:[#allocation5 + $0x2c] sm:$0xf]
    %v241 = vld [vmem:[#allocation5 + $0x30] sm:$0xf]
    %v242 = vld [vmem:[#allocation5 + $0x34] sm:$0xf]
    %v243 = vld [vmem:[#allocation5 + $0x38] sm:$0xf]
    %v244 = vld [vmem:[#allocation5 + $0x3c] sm:$0xf]
    %v245 = vld [vmem:[%s6] sm:$0x1]
    %v247 = vlaneseq
    %v248 = vshrl.u32 %v247, 7
    %v249 = vsub.s32 0, %v248
    %v250 = vrot.slane %v245, %v249
    %v268 = vunpack.c.l.b16 %v229
    %v269 = vunpack.c.l.b16 %v230
    %v270 = vunpack.c.l.b16 %v231
    %v271 = vunpack.c.l.b16 %v232
    %v272 = vunpack.c.l.b16 %v233
    %v273 = vunpack.c.l.b16 %v234
    %v274 = vunpack.c.l.b16 %v235
    %v275 = vunpack.c.l.b16 %v236
    %v276 = vunpack.c.l.b16 %v237
    %v277 = vunpack.c.l.b16 %v238
    %v278 = vunpack.c.l.b16 %v239
    %v279 = vunpack.c.l.b16 %v240
    %v280 = vunpack.c.l.b16 %v241
    %v281 = vunpack.c.l.b16 %v242
    %v282 = vunpack.c.l.b16 %v243
    %v283 = vunpack.c.l.b16 %v244
    %v284 = vpack.c.b16 %v269, %v268
    %v285 = vpack.c.b16 %v271, %v270
    %v286 = vpack.c.b16 %v273, %v272
    %v287 = vpack.c.b16 %v275, %v274
    %v288 = vpack.c.b16 %v277, %v276
    %v289 = vpack.c.b16 %v279, %v278
    %v290 = vpack.c.b16 %v281, %v280
    %v291 = vpack.c.b16 %v283, %v282
    %300 = vmatprep.subr.bf16.mxu0 0
    %301 = vmatpush1.bf16.msra.mxu0 %v284
    %302 = vmatprep.subr.bf16.mxu0 0
    %303 = vmatpush1.bf16.msra.mxu0 %v285
    %304 = vmatprep.subr.bf16.mxu0 0
    %305 = vmatpush1.bf16.msra.mxu0 %v286
    %306 = vmatprep.subr.bf16.mxu0 0
    %307 = vmatpush1.bf16.msra.mxu0 %v287
    %308 = vmatprep.subr.bf16.mxu0 0
    %309 = vmatpush1.bf16.msra.mxu0 %v288
    %310 = vmatprep.subr.bf16.mxu0 0
    %311 = vmatpush1.bf16.msra.mxu0 %v289
    %312 = vmatprep.subr.bf16.mxu0 0
    %313 = vmatpush1.bf16.msra.mxu0 %v290
    %314 = vmatprep.subr.bf16.mxu0 0
    %315 = vmatpush1.bf16.msra.mxu0 %v291
    %316 = vmatprep.subr.bf16.mxu0 0
    %317 = vmatpush1.bf16.msra.mxu0 0
    %318 = vmatprep.subr.bf16.mxu0 0
    %319 = vmatpush1.bf16.msra.mxu0 0
    %320 = vmatprep.subr.bf16.mxu0 0
    %321 = vmatpush1.bf16.msra.mxu0 0
    %322 = vmatprep.subr.bf16.mxu0 0
    %323 = vmatpush1.bf16.msra.mxu0 0
    %324 = vmatprep.subr.bf16.mxu0 0
    %325 = vmatpush1.bf16.msra.mxu0 0
    %326 = vmatprep.subr.bf16.mxu0 0
    %327 = vmatpush1.bf16.msra.mxu0 0
    %328 = vmatprep.subr.bf16.mxu0 0
    %329 = vmatpush1.bf16.msra.mxu0 0
    %330 = vmatprep.subr.bf16.mxu0 0
    %331 = vmatpush1.bf16.msra.mxu0 0
    %332 = vmatprep.mubr.bf16.mxu0 0
    %333 = vmatmul.mubr.bf16.gmra.mrb[0].mxu0 %v228
    %v334 = vpop.f32.mrb[0].mxu0
    %v335 = vadd.f32 %v250, %v334
    %v336 = vpop.f32.mrb[0].mxu0
    %v337 = vpop.f32.mrb[0].mxu0
    %v338 = vpop.f32.mrb[0].mxu0
    %339 = vdwg.mxu0
    %v340 = vrot.slane %v335, 4
    %v341 = vmax.f32 %v335, %v340
    %v342 = vrot.slane %v341, 2
    %v343 = vmax.f32 %v341, %v342
    %v344 = vrot.slane %v343, 1
    %v345 = vmax.f32 %v343, %v344
    %v346 = vsub.f32 %v335, %v345
    %v347 = vmul.f32 %v346, 1.442695
    %v348 = vpow.pop %v347
    %v349 = vrot.slane %v348, 4
    %v350 = vadd.f32 %v348, %v349
    %v351 = vrot.slane %v350, 2
    %v352 = vadd.f32 %v350, %v351
    %v353 = vrot.slane %v352, 1
    %v354 = vadd.f32 %v352, %v353
    %v355 = vrcp.pop %v354
    %v356 = vmul.f32 1.0, %v355
    %v357 = vmul.f32 %v348, %v356
    %358 = vst [vmem:[#allocation7] sm:$0xff] %v357
    // Predicated region
    $region38: #{tpu_custom_call.1} parent=1 // pred_check
      _
    $region39: #{tpu_custom_call.1} parent=1 // pred_check_branch
      %360 = sbr.rel (0) target = $region41
    $region40: #{tpu_custom_call.1} parent=1 // pred_region
      %s362 = ssub.s32 128, 128
      %363 = vsyncadd [#allocation4], %s362
      %s365 = sshll.u32 [#allocation7], 4
      %s366 = int_to_ptr.vmem [resolvable:$true] %s365
      %368 = dma.vmem_to_hbm [thread:$0]  %s366, 128, %s7, [#allocation4]
    $region41: #{tpu_custom_call.1} parent=1 // pred_fallthru
      _
    // Predicated region
    $region42: #{tpu_custom_call.1} parent=1 // pred_check
      _
    $region43: #{tpu_custom_call.1} parent=1 // pred_check_branch
      %370 = sbr.rel (0) target = $region45
    $region44: #{tpu_custom_call.1} parent=1 // pred_region
      %371 = dma.done [#allocation4], 128
    $region45: #{tpu_custom_call.1} parent=1 // pred_fallthru
      _
    %372 = vsyncpa [#allocation3], 1
    %373 = vsyncpa [#allocation6], 1
    %374 = vsyncpa [#allocation4], 1

</llo_original>
